<compile_context>
chip_gen: v5e
topology: v5e:2x2
jax: 0.10.0
libtpu: 0.0.40
codegen_flags: <defaults>
</compile_context>

<pallas_src>
import functools

import jax
import jax.numpy as jnp
import numpy as np
from jax.experimental import pallas as pl
from jax.experimental.pallas import tpu as pltpu


KH = KW = 3
STRIDE = 2


# ----------------------------- Pallas kernel -------------------------------

def critic_kernel(patches_ref, act_ref, cw_ref, cb_ref, wtx_ref, tvec_ref,
                  qw1_ref, qb12_ref, qw2_ref, qw3_ref, qb3_ref, out_ref,
                  *, F, Cout, BT):
    """Fused Conv(3x3,s2)+ReLU -> Linear+LayerNorm+Tanh -> concat(action)
    -> two stacked Q MLPs.  Processes BT batch rows per grid step."""
    cw = cw_ref[...]                     # [Cout, C*9]
    cb = cb_ref[...]                     # [Cout, 1]
    wtx = wtx_ref[...]                   # [P, Cout*F]  (repacked trunk weight)
    tvec = tvec_ref[...]                 # [3, F]: trunk bias, ln gamma, ln beta

    # --- conv encoder + trunk linear, one batch row at a time (conv result
    #     stays in registers/VMEM; no HBM writeback) ------------------------
    t_rows = []
    for j in range(BT):                  # static unroll, BT <= 8
        pj = patches_ref[j]              # [C*9, P]
        ct = jnp.maximum(
            jnp.dot(cw, pj, preferred_element_type=jnp.float32) + cb, 0.0)   # [Cout, P]
        # m[co, co'*F + f] = sum_p ct[co, p] * wt[co'*P + p, f]
        m = jnp.dot(ct, wtx, preferred_element_type=jnp.float32)             # [Cout, Cout*F]
        # generalized diagonal:  t[f] = sum_co m[co, co*F + f]
        acc = m[0:1, 0:F]
        for co in range(1, Cout):
            acc = acc + m[co:co + 1, co * F:(co + 1) * F]
        t_rows.append(acc)                                                    # [1, F]
    t = jnp.concatenate(t_rows, axis=0) + tvec[0:1, :]                        # [BT, F]

    # --- LayerNorm (single-pass moments) + Tanh -----------------------------
    inv_f = 1.0 / F
    mean = jnp.sum(t, axis=-1, keepdims=True) * inv_f
    var = jnp.sum(t * t, axis=-1, keepdims=True) * inv_f - mean * mean
    h = jnp.tanh((t - mean) * jax.lax.rsqrt(var + 1e-5) * tvec[1:2, :]
                 + tvec[2:3, :])                                              # [BT, F]

    # --- Q1 & Q2 stacked along the 2*hidden lane axis ------------------------
    ha = jnp.concatenate([h, act_ref[...]], axis=-1)                          # [BT, F+A]
    b12 = qb12_ref[...]                                                       # [2, 2H]
    z1 = jnp.maximum(
        jnp.dot(ha, qw1_ref[...], preferred_element_type=jnp.float32)
        + b12[0:1, :], 0.0)                                                   # [BT, 2H]
    z2 = jnp.maximum(
        jnp.dot(z1, qw2_ref[...], preferred_element_type=jnp.float32)
        + b12[1:2, :], 0.0)                                                   # [BT, 2H]
    out_ref[...] = (jnp.dot(z2, qw3_ref[...], preferred_element_type=jnp.float32)
                    + qb3_ref[...])                                           # [BT, 2]


def _full_spec(shape):
    """Whole-array block, constant index map (no re-DMA across grid steps)."""
    n = len(shape)
    return pl.BlockSpec(shape, lambda i, _n=n: (0,) * _n)


# ------------------------- host-side parameter prep ------------------------

def prepare_params(params):
    """One-time packing: conv weight flattened, trunk weight repacked for the
    diagonal-extraction trick, Q1/Q2 stacked along the lane axis."""
    Cout, C, _, _ = params["conv_w"].shape
    obs_dim, F = params["wt"].shape
    P = obs_dim // Cout                                    # Ho*Wo
    H = params["q1_w2"].shape[0]
    zHH = jnp.zeros((H, H), jnp.float32)
    zH1 = jnp.zeros((H, 1), jnp.float32)

    packed = {
        "conv_w": params["conv_w"].reshape(Cout, C * KH * KW),   # [Cout, K]
        "conv_b": params["conv_b"].reshape(Cout, 1),             # [Cout, 1]
        # WTX[p, co*F + f] = wt[co*P + p, f]  (NCHW-flat row order preserved)
        "wtx": params["wt"].reshape(Cout, P, F).transpose(1, 0, 2).reshape(P, Cout * F),
        "trunk_vec": jnp.concatenate(
            [params["bt"], params["ln_g"], params["ln_b"]], axis=0),          # [3, F]
        # Q layer 1: rows = [h | action], columns = [Q1 | Q2]  -> [F+A, 2H]
        "q_w1": jnp.concatenate(
            [jnp.concatenate([params["q1_w1h"], params["q2_w1h"]], axis=1),
             jnp.concatenate([params["q1_w1a"], params["q2_w1a"]], axis=1)], axis=0),
        "q_b12": jnp.concatenate(
            [jnp.concatenate([params["q1_b1"], params["q2_b1"]], axis=1),
             jnp.concatenate([params["q1_b2"], params["q2_b2"]], axis=1)], axis=0),
        # Q layer 2 block-diagonal [2H, 2H]
        "q_w2": jnp.concatenate(
            [jnp.concatenate([params["q1_w2"], zHH], axis=1),
             jnp.concatenate([zHH, params["q2_w2"]], axis=1)], axis=0),
        # Q layer 3 -> [2H, 2]
        "q_w3": jnp.concatenate(
            [jnp.concatenate([params["q1_w3"], zH1], axis=1),
             jnp.concatenate([zH1, params["q2_w3"]], axis=1)], axis=0),
        "q_b3": jnp.concatenate([params["q1_b3"], params["q2_b3"]], axis=1),   # [1, 2]
    }
    return packed


# ------------------------------ JAX wrapper --------------------------------

def _im2col(obs, ho, wo):
    """obs [B,C,H,W] -> patches [B, C*KH*KW, Ho*Wo] (k rows, spatial lanes)."""
    b, c, _, _ = obs.shape
    cols = []
    for kh in range(KH):
        for kw in range(KW):
            cols.append(obs[:, :, kh:kh + STRIDE * ho:STRIDE,
                               kw:kw + STRIDE * wo:STRIDE])   # [B,C,Ho,Wo]
    patches = jnp.stack(cols, axis=2)                         # [B, C, 9, Ho, Wo]
    return patches.reshape(b, c * KH * KW, ho * wo)           # [B, C*9, Ho*Wo]


@jax.jit
def critic_forward(obs, action, packed):
    B, C, H, W = obs.shape
    Ho = (H - KH) // STRIDE + 1
    Wo = (W - KW) // STRIDE + 1
    P = Ho * Wo
    K = C * KH * KW
    Cout = packed["conv_b"].shape[0]
    F = packed["trunk_vec"].shape[1]
    A = action.shape[1]

    patches = _im2col(obs, Ho, Wo)                            # [B, K, P]

    # Batch-row tiling: single step at B=2, scales (and goes parallel on
    # v7x's two TensorCores) for larger batches.
    BT = B if (B <= 8 or B % 8 != 0) else 8
    nb = pl.cdiv(B, BT)

    inputs = [patches, action, packed["conv_w"], packed["conv_b"],
              packed["wtx"], packed["trunk_vec"], packed["q_w1"],
              packed["q_b12"], packed["q_w2"], packed["q_w3"], packed["q_b3"]]
    in_specs = ([pl.BlockSpec((BT, K, P), lambda i: (i, 0, 0)),
                 pl.BlockSpec((BT, A), lambda i: (i, 0))]
                + [_full_spec(x.shape) for x in inputs[2:]])

    q = pl.pallas_call(
        functools.partial(critic_kernel, F=F, Cout=Cout, BT=BT),
        grid=(nb,),
        in_specs=in_specs,
        out_specs=pl.BlockSpec((BT, 2), lambda i: (i, 0)),
        out_shape=jax.ShapeDtypeStruct((B, 2), jnp.float32),
        compiler_params=pltpu.CompilerParams(dimension_semantics=("parallel",)),
    )(*inputs)

    return q[:, 0:1], q[:, 1:2]          # (Q1, Q2), each [B, 1]


# ------------------------- pure-JAX reference check ------------------------

def critic_reference(obs, action, params):
    x = jax.lax.conv_general_dilated(
        obs, params["conv_w"], (STRIDE, STRIDE), "VALID",
        dimension_numbers=("NCHW", "OIHW", "NCHW"))
    x = jnp.maximum(x + params["conv_b"][None, :, None, None], 0.0)
    feat = x.reshape(x.shape[0], -1)

    t = feat @ params["wt"] + params["bt"][0]
    mean = jnp.mean(t, axis=-1, keepdims=True)
    var = jnp.mean((t - mean) ** 2, axis=-1, keepdims=True)
    h = jnp.tanh((t - mean) / jnp.sqrt(var + 1e-5) * params["ln_g"][0]
                 + params["ln_b"][0])
    hc = jnp.concatenate([h, action], axis=-1)

    def q(prefix):
        w1 = jnp.concatenate([params[prefix + "_w1h"], params[prefix + "_w1a"]], 0)
        z = jnp.maximum(hc @ w1 + params[prefix + "_b1"][0], 0.0)
        z = jnp.maximum(z @ params[prefix + "_w2"] + params[prefix + "_b2"][0], 0.0)
        return z @ params[prefix + "_w3"] + params[prefix + "_b3"][0]

    return q("q1"), q("q2")


# ----------------------------------- main -----------------------------------

if __name__ == "__main__":
    B, C, H, W = 2, 4, 16, 16
    action_dim, feature_dim, hidden_dim = 6, 32, 64
    Cout = 8
    Ho = Wo = (H - KH) // STRIDE + 1          # 7
    obs_dim = Cout * Ho * Wo                  # 392 (cnn_encoder output dim)

    key = jax.random.PRNGKey(0)
    ks = jax.random.split(key, 24)

    def rnd(k, shape, scale=0.1):
        return (scale * jax.random.normal(k, shape)).astype(jnp.float32)

    params = {
        "conv_w": rnd(ks[0], (Cout, C, KH, KW)),
        "conv_b": rnd(ks[1], (Cout,)),
        # trunk: Linear(obs_dim, feature_dim) + LayerNorm(feature_dim) + Tanh
        "wt": rnd(ks[2], (obs_dim, feature_dim)),
        "bt": rnd(ks[3], (1, feature_dim)),
        "ln_g": jnp.ones((1, feature_dim), jnp.float32),
        "ln_b": jnp.zeros((1, feature_dim), jnp.float32),
    }
    # Q nets: Linear(feature_dim+action_dim, hidden) ReLU, Linear(hidden,hidden)
    # ReLU, Linear(hidden, 1).  First layer split into [h | action] parts.
    for qi, base in ((4, "q1"), (14, "q2")):
        params[base + "_w1h"] = rnd(ks[qi + 0], (feature_dim, hidden_dim))
        params[base + "_w1a"] = rnd(ks[qi + 1], (action_dim, hidden_dim))
        params[base + "_b1"] = rnd(ks[qi + 2], (1, hidden_dim))
        params[base + "_w2"] = rnd(ks[qi + 3], (hidden_dim, hidden_dim))
        params[base + "_b2"] = rnd(ks[qi + 4], (1, hidden_dim))
        params[base + "_w3"] = rnd(ks[qi + 5], (hidden_dim, 1))
        params[base + "_b3"] = rnd(ks[qi + 6], (1, 1))

    obs = jax.random.normal(ks[22], (B, C, H, W), jnp.float32)
    action = jax.random.normal(ks[23], (B, action_dim), jnp.float32)

    packed = prepare_params(params)           # one-time host-side packing
    q1, q2 = critic_forward(obs, action, packed)
    jax.block_until_ready((q1, q2))

    r1, r2 = critic_reference(obs, action, params)
    np.testing.assert_allclose(np.asarray(q1), np.asarray(r1), rtol=1e-4, atol=1e-4)
    np.testing.assert_allclose(np.asarray(q2), np.asarray(r2), rtol=1e-4, atol=1e-4)

    print("KERNEL_OK")
</pallas_src>

<mosaic_0001>
module attributes {stable_mosaic.version = 11 : i64} {
  func.func @critic_kernel(%arg0: i32, %arg1: memref<2x36x49xf32, #tpu.memory_space<vmem>>, %arg2: memref<2x6xf32, #tpu.memory_space<vmem>>, %arg3: memref<8x36xf32, #tpu.memory_space<vmem>>, %arg4: memref<8x1xf32, #tpu.memory_space<vmem>>, %arg5: memref<49x256xf32, #tpu.memory_space<vmem>>, %arg6: memref<3x32xf32, #tpu.memory_space<vmem>>, %arg7: memref<38x128xf32, #tpu.memory_space<vmem>>, %arg8: memref<2x128xf32, #tpu.memory_space<vmem>>, %arg9: memref<128x128xf32, #tpu.memory_space<vmem>>, %arg10: memref<128x2xf32, #tpu.memory_space<vmem>>, %arg11: memref<1x2xf32, #tpu.memory_space<vmem>>, %arg12: memref<2x2xf32, #tpu.memory_space<vmem>>) attributes {dimension_semantics = [#tpu.dimension_semantics<parallel>], iteration_bounds = array<i64: 1>, scalar_prefetch = 0 : i64, scratch_operands = 0 : i64, tpu.core_type = #tpu.core_type<tc>, window_params = [{transform_indices = @transform_0, window_bounds = array<i64: 2, 36, 49>}, {transform_indices = @transform_1, window_bounds = array<i64: 2, 6>}, {pipeline_mode = #tpu.pipeline_mode<synchronous>, transform_indices = @transform_2, window_bounds = array<i64: 8, 36>}, {pipeline_mode = #tpu.pipeline_mode<synchronous>, transform_indices = @transform_3, window_bounds = array<i64: 8, 1>}, {pipeline_mode = #tpu.pipeline_mode<synchronous>, transform_indices = @transform_4, window_bounds = array<i64: 49, 256>}, {pipeline_mode = #tpu.pipeline_mode<synchronous>, transform_indices = @transform_5, window_bounds = array<i64: 3, 32>}, {pipeline_mode = #tpu.pipeline_mode<synchronous>, transform_indices = @transform_6, window_bounds = array<i64: 38, 128>}, {pipeline_mode = #tpu.pipeline_mode<synchronous>, transform_indices = @transform_7, window_bounds = array<i64: 2, 128>}, {pipeline_mode = #tpu.pipeline_mode<synchronous>, transform_indices = @transform_8, window_bounds = array<i64: 128, 128>}, {pipeline_mode = #tpu.pipeline_mode<synchronous>, transform_indices = @transform_9, window_bounds = array<i64: 128, 2>}, {pipeline_mode = #tpu.pipeline_mode<synchronous>, transform_indices = @transform_10, window_bounds = array<i64: 1, 2>}, {transform_indices = @transform_11, window_bounds = array<i64: 2, 2>}]} {
    %c0 = arith.constant 0 : index
    %c0_0 = arith.constant 0 : index
    %0 = vector.load %arg3[%c0, %c0_0] : memref<8x36xf32, #tpu.memory_space<vmem>>, vector<8x36xf32>
    %c0_1 = arith.constant 0 : index
    %c0_2 = arith.constant 0 : index
    %1 = vector.load %arg4[%c0_1, %c0_2] : memref<8x1xf32, #tpu.memory_space<vmem>>, vector<8x1xf32>
    %c0_3 = arith.constant 0 : index
    %c0_4 = arith.constant 0 : index
    %2 = vector.load %arg5[%c0_3, %c0_4] : memref<49x256xf32, #tpu.memory_space<vmem>>, vector<49x256xf32>
    %c0_5 = arith.constant 0 : index
    %c0_6 = arith.constant 0 : index
    %3 = vector.load %arg6[%c0_5, %c0_6] : memref<3x32xf32, #tpu.memory_space<vmem>>, vector<3x32xf32>
    %c0_7 = arith.constant 0 : index
    %c0_8 = arith.constant 0 : index
    %c0_9 = arith.constant 0 : index
    %4 = vector.load %arg1[%c0_7, %c0_8, %c0_9] : memref<2x36x49xf32, #tpu.memory_space<vmem>>, vector<1x36x49xf32>
    %5 = vector.shape_cast %4 : vector<1x36x49xf32> to vector<36x49xf32>
    %cst = arith.constant dense<0.000000e+00> : vector<8x49xf32>
    %6 = tpu.matmul %0, %5, %cst {dimension_numbers = #tpu.dot_dimension_numbers<[1], [0], [0], [1], [0, 0, 1, 1], [], []>} : vector<8x36xf32>, vector<36x49xf32>, vector<8x49xf32> -> vector<8x49xf32>
    %7 = vector.broadcast %1 : vector<8x1xf32> to vector<8x49xf32>
    %8 = arith.addf %6, %7 : vector<8x49xf32>
    %cst_10 = arith.constant 0.000000e+00 : f32
    %9 = vector.broadcast %cst_10 : f32 to vector<8x49xf32>
    %10 = arith.maximumf %8, %9 : vector<8x49xf32>
    %cst_11 = arith.constant dense<0.000000e+00> : vector<8x256xf32>
    %11 = tpu.matmul %10, %2, %cst_11 {dimension_numbers = #tpu.dot_dimension_numbers<[1], [0], [0], [1], [0, 0, 1, 1], [], []>} : vector<8x49xf32>, vector<49x256xf32>, vector<8x256xf32> -> vector<8x256xf32>
    %12 = vector.extract_strided_slice %11 {offsets = [0, 0], sizes = [1, 32], strides = [1, 1]} : vector<8x256xf32> to vector<1x32xf32>
    %13 = vector.extract_strided_slice %11 {offsets = [1, 32], sizes = [1, 32], strides = [1, 1]} : vector<8x256xf32> to vector<1x32xf32>
    %14 = arith.addf %12, %13 : vector<1x32xf32>
    %15 = vector.extract_strided_slice %11 {offsets = [2, 64], sizes = [1, 32], strides = [1, 1]} : vector<8x256xf32> to vector<1x32xf32>
    %16 = arith.addf %14, %15 : vector<1x32xf32>
    %17 = vector.extract_strided_slice %11 {offsets = [3, 96], sizes = [1, 32], strides = [1, 1]} : vector<8x256xf32> to vector<1x32xf32>
    %18 = arith.addf %16, %17 : vector<1x32xf32>
    %19 = vector.extract_strided_slice %11 {offsets = [4, 128], sizes = [1, 32], strides = [1, 1]} : vector<8x256xf32> to vector<1x32xf32>
    %20 = arith.addf %18, %19 : vector<1x32xf32>
    %21 = vector.extract_strided_slice %11 {offsets = [5, 160], sizes = [1, 32], strides = [1, 1]} : vector<8x256xf32> to vector<1x32xf32>
    %22 = arith.addf %20, %21 : vector<1x32xf32>
    %23 = vector.extract_strided_slice %11 {offsets = [6, 192], sizes = [1, 32], strides = [1, 1]} : vector<8x256xf32> to vector<1x32xf32>
    %24 = arith.addf %22, %23 : vector<1x32xf32>
    %25 = vector.extract_strided_slice %11 {offsets = [7, 224], sizes = [1, 32], strides = [1, 1]} : vector<8x256xf32> to vector<1x32xf32>
    %26 = arith.addf %24, %25 : vector<1x32xf32>
    %c1 = arith.constant 1 : index
    %c0_12 = arith.constant 0 : index
    %c0_13 = arith.constant 0 : index
    %27 = vector.load %arg1[%c1, %c0_12, %c0_13] : memref<2x36x49xf32, #tpu.memory_space<vmem>>, vector<1x36x49xf32>
    %28 = vector.shape_cast %27 : vector<1x36x49xf32> to vector<36x49xf32>
    %cst_14 = arith.constant dense<0.000000e+00> : vector<8x49xf32>
    %29 = tpu.matmul %0, %28, %cst_14 {dimension_numbers = #tpu.dot_dimension_numbers<[1], [0], [0], [1], [0, 0, 1, 1], [], []>} : vector<8x36xf32>, vector<36x49xf32>, vector<8x49xf32> -> vector<8x49xf32>
    %30 = vector.broadcast %1 : vector<8x1xf32> to vector<8x49xf32>
    %31 = arith.addf %29, %30 : vector<8x49xf32>
    %cst_15 = arith.constant 0.000000e+00 : f32
    %32 = vector.broadcast %cst_15 : f32 to vector<8x49xf32>
    %33 = arith.maximumf %31, %32 : vector<8x49xf32>
    %cst_16 = arith.constant dense<0.000000e+00> : vector<8x256xf32>
    %34 = tpu.matmul %33, %2, %cst_16 {dimension_numbers = #tpu.dot_dimension_numbers<[1], [0], [0], [1], [0, 0, 1, 1], [], []>} : vector<8x49xf32>, vector<49x256xf32>, vector<8x256xf32> -> vector<8x256xf32>
    %35 = vector.extract_strided_slice %34 {offsets = [0, 0], sizes = [1, 32], strides = [1, 1]} : vector<8x256xf32> to vector<1x32xf32>
    %36 = vector.extract_strided_slice %34 {offsets = [1, 32], sizes = [1, 32], strides = [1, 1]} : vector<8x256xf32> to vector<1x32xf32>
    %37 = arith.addf %35, %36 : vector<1x32xf32>
    %38 = vector.extract_strided_slice %34 {offsets = [2, 64], sizes = [1, 32], strides = [1, 1]} : vector<8x256xf32> to vector<1x32xf32>
    %39 = arith.addf %37, %38 : vector<1x32xf32>
    %40 = vector.extract_strided_slice %34 {offsets = [3, 96], sizes = [1, 32], strides = [1, 1]} : vector<8x256xf32> to vector<1x32xf32>
    %41 = arith.addf %39, %40 : vector<1x32xf32>
    %42 = vector.extract_strided_slice %34 {offsets = [4, 128], sizes = [1, 32], strides = [1, 1]} : vector<8x256xf32> to vector<1x32xf32>
    %43 = arith.addf %41, %42 : vector<1x32xf32>
    %44 = vector.extract_strided_slice %34 {offsets = [5, 160], sizes = [1, 32], strides = [1, 1]} : vector<8x256xf32> to vector<1x32xf32>
    %45 = arith.addf %43, %44 : vector<1x32xf32>
    %46 = vector.extract_strided_slice %34 {offsets = [6, 192], sizes = [1, 32], strides = [1, 1]} : vector<8x256xf32> to vector<1x32xf32>
    %47 = arith.addf %45, %46 : vector<1x32xf32>
    %48 = vector.extract_strided_slice %34 {offsets = [7, 224], sizes = [1, 32], strides = [1, 1]} : vector<8x256xf32> to vector<1x32xf32>
    %49 = arith.addf %47, %48 : vector<1x32xf32>
    %50 = tpu.concatenate %26, %49 in 0 : vector<1x32xf32>, vector<1x32xf32> -> vector<2x32xf32>
    %51 = vector.extract_strided_slice %3 {offsets = [0, 0], sizes = [1, 32], strides = [1, 1]} : vector<3x32xf32> to vector<1x32xf32>
    %52 = vector.broadcast %51 : vector<1x32xf32> to vector<2x32xf32>
    %53 = arith.addf %50, %52 : vector<2x32xf32>
    %cst_17 = arith.constant dense<0.000000e+00> : vector<2xf32>
    %54 = vector.multi_reduction <add>, %53, %cst_17 [1] : vector<2x32xf32> to vector<2xf32>
    %55 = vector.shape_cast %54 : vector<2xf32> to vector<2x1xf32>
    %cst_18 = arith.constant 3.125000e-02 : f32
    %56 = vector.broadcast %cst_18 : f32 to vector<2x1xf32>
    %57 = arith.mulf %55, %56 : vector<2x1xf32>
    %58 = arith.mulf %53, %53 : vector<2x32xf32>
    %cst_19 = arith.constant dense<0.000000e+00> : vector<2xf32>
    %59 = vector.multi_reduction <add>, %58, %cst_19 [1] : vector<2x32xf32> to vector<2xf32>
    %60 = vector.shape_cast %59 : vector<2xf32> to vector<2x1xf32>
    %cst_20 = arith.constant 3.125000e-02 : f32
    %61 = vector.broadcast %cst_20 : f32 to vector<2x1xf32>
    %62 = arith.mulf %60, %61 : vector<2x1xf32>
    %63 = arith.mulf %57, %57 : vector<2x1xf32>
    %64 = arith.subf %62, %63 : vector<2x1xf32>
    %65 = vector.broadcast %57 : vector<2x1xf32> to vector<2x32xf32>
    %66 = arith.subf %53, %65 : vector<2x32xf32>
    %cst_21 = arith.constant 9.99999974E-6 : f32
    %67 = vector.broadcast %cst_21 : f32 to vector<2x1xf32>
    %68 = arith.addf %64, %67 : vector<2x1xf32>
    %69 = math.rsqrt %68 : vector<2x1xf32>
    %70 = vector.broadcast %69 : vector<2x1xf32> to vector<2x32xf32>
    %71 = arith.mulf %66, %70 : vector<2x32xf32>
    %72 = vector.extract_strided_slice %3 {offsets = [1, 0], sizes = [1, 32], strides = [1, 1]} : vector<3x32xf32> to vector<1x32xf32>
    %73 = vector.broadcast %72 : vector<1x32xf32> to vector<2x32xf32>
    %74 = arith.mulf %71, %73 : vector<2x32xf32>
    %75 = vector.extract_strided_slice %3 {offsets = [2, 0], sizes = [1, 32], strides = [1, 1]} : vector<3x32xf32> to vector<1x32xf32>
    %76 = vector.broadcast %75 : vector<1x32xf32> to vector<2x32xf32>
    %77 = arith.addf %74, %76 : vector<2x32xf32>
    %78 = math.tanh %77 : vector<2x32xf32>
    %c0_22 = arith.constant 0 : index
    %c0_23 = arith.constant 0 : index
    %79 = vector.load %arg2[%c0_22, %c0_23] : memref<2x6xf32, #tpu.memory_space<vmem>>, vector<2x6xf32>
    %80 = tpu.concatenate %78, %79 in 1 : vector<2x32xf32>, vector<2x6xf32> -> vector<2x38xf32>
    %c0_24 = arith.constant 0 : index
    %c0_25 = arith.constant 0 : index
    %81 = vector.load %arg8[%c0_24, %c0_25] : memref<2x128xf32, #tpu.memory_space<vmem>>, vector<2x128xf32>
    %c0_26 = arith.constant 0 : index
    %c0_27 = arith.constant 0 : index
    %82 = vector.load %arg7[%c0_26, %c0_27] : memref<38x128xf32, #tpu.memory_space<vmem>>, vector<38x128xf32>
    %cst_28 = arith.constant dense<0.000000e+00> : vector<2x128xf32>
    %83 = tpu.matmul %80, %82, %cst_28 {dimension_numbers = #tpu.dot_dimension_numbers<[1], [0], [0], [1], [0, 0, 1, 1], [], []>} : vector<2x38xf32>, vector<38x128xf32>, vector<2x128xf32> -> vector<2x128xf32>
    %84 = vector.extract_strided_slice %81 {offsets = [0, 0], sizes = [1, 128], strides = [1, 1]} : vector<2x128xf32> to vector<1x128xf32>
    %85 = vector.broadcast %84 : vector<1x128xf32> to vector<2x128xf32>
    %86 = arith.addf %83, %85 : vector<2x128xf32>
    %cst_29 = arith.constant 0.000000e+00 : f32
    %87 = vector.broadcast %cst_29 : f32 to vector<2x128xf32>
    %88 = arith.maximumf %86, %87 : vector<2x128xf32>
    %c0_30 = arith.constant 0 : index
    %c0_31 = arith.constant 0 : index
    %89 = vector.load %arg9[%c0_30, %c0_31] : memref<128x128xf32, #tpu.memory_space<vmem>>, vector<128x128xf32>
    %cst_32 = arith.constant dense<0.000000e+00> : vector<2x128xf32>
    %90 = tpu.matmul %88, %89, %cst_32 {dimension_numbers = #tpu.dot_dimension_numbers<[1], [0], [0], [1], [0, 0, 1, 1], [], []>} : vector<2x128xf32>, vector<128x128xf32>, vector<2x128xf32> -> vector<2x128xf32>
    %91 = vector.extract_strided_slice %81 {offsets = [1, 0], sizes = [1, 128], strides = [1, 1]} : vector<2x128xf32> to vector<1x128xf32>
    %92 = vector.broadcast %91 : vector<1x128xf32> to vector<2x128xf32>
    %93 = arith.addf %90, %92 : vector<2x128xf32>
    %cst_33 = arith.constant 0.000000e+00 : f32
    %94 = vector.broadcast %cst_33 : f32 to vector<2x128xf32>
    %95 = arith.maximumf %93, %94 : vector<2x128xf32>
    %c0_34 = arith.constant 0 : index
    %c0_35 = arith.constant 0 : index
    %96 = vector.load %arg10[%c0_34, %c0_35] : memref<128x2xf32, #tpu.memory_space<vmem>>, vector<128x2xf32>
    %cst_36 = arith.constant dense<0.000000e+00> : vector<2x2xf32>
    %97 = tpu.matmul %95, %96, %cst_36 {dimension_numbers = #tpu.dot_dimension_numbers<[1], [0], [0], [1], [0, 0, 1, 1], [], []>} : vector<2x128xf32>, vector<128x2xf32>, vector<2x2xf32> -> vector<2x2xf32>
    %c0_37 = arith.constant 0 : index
    %c0_38 = arith.constant 0 : index
    %98 = vector.load %arg11[%c0_37, %c0_38] : memref<1x2xf32, #tpu.memory_space<vmem>>, vector<1x2xf32>
    %99 = vector.broadcast %98 : vector<1x2xf32> to vector<2x2xf32>
    %100 = arith.addf %97, %99 : vector<2x2xf32>
    %c0_39 = arith.constant 0 : index
    %c0_40 = arith.constant 0 : index
    %101 = vector.load %arg12[%c0_39, %c0_40] : memref<2x2xf32, #tpu.memory_space<vmem>>, vector<2x2xf32>
    tpu.vector_store %arg12[%c0_39, %c0_40], %100 {strides = array<i32>} : memref<2x2xf32, #tpu.memory_space<vmem>>, vector<2x2xf32>,
    return
  }
  func.func @transform_0(%arg0: i32) -> (i32, i32, i32) {
    %c0_i32 = arith.constant 0 : i32
    %c0_i32_0 = arith.constant 0 : i32
    %c0_i32_1 = arith.constant 0 : i32
    return %arg0, %c0_i32, %c0_i32_0 : i32, i32, i32
  }
  func.func @transform_1(%arg0: i32) -> (i32, i32) {
    %c0_i32 = arith.constant 0 : i32
    %c0_i32_0 = arith.constant 0 : i32
    return %arg0, %c0_i32 : i32, i32
  }
  func.func @transform_2(%arg0: i32) -> (i32, i32) {
    %c0_i32 = arith.constant 0 : i32
    %c0_i32_0 = arith.constant 0 : i32
    %c0_i32_1 = arith.constant 0 : i32
    return %c0_i32, %c0_i32_0 : i32, i32
  }
  func.func @transform_3(%arg0: i32) -> (i32, i32) {
    %c0_i32 = arith.constant 0 : i32
    %c0_i32_0 = arith.constant 0 : i32
    %c0_i32_1 = arith.constant 0 : i32
    return %c0_i32, %c0_i32_0 : i32, i32
  }
  func.func @transform_4(%arg0: i32) -> (i32, i32) {
    %c0_i32 = arith.constant 0 : i32
    %c0_i32_0 = arith.constant 0 : i32
    %c0_i32_1 = arith.constant 0 : i32
    return %c0_i32, %c0_i32_0 : i32, i32
  }
  func.func @transform_5(%arg0: i32) -> (i32, i32) {
    %c0_i32 = arith.constant 0 : i32
    %c0_i32_0 = arith.constant 0 : i32
    %c0_i32_1 = arith.constant 0 : i32
    return %c0_i32, %c0_i32_0 : i32, i32
  }
  func.func @transform_6(%arg0: i32) -> (i32, i32) {
    %c0_i32 = arith.constant 0 : i32
    %c0_i32_0 = arith.constant 0 : i32
    %c0_i32_1 = arith.constant 0 : i32
    return %c0_i32, %c0_i32_0 : i32, i32
  }
  func.func @transform_7(%arg0: i32) -> (i32, i32) {
    %c0_i32 = arith.constant 0 : i32
    %c0_i32_0 = arith.constant 0 : i32
    %c0_i32_1 = arith.constant 0 : i32
    return %c0_i32, %c0_i32_0 : i32, i32
  }
  func.func @transform_8(%arg0: i32) -> (i32, i32) {
    %c0_i32 = arith.constant 0 : i32
    %c0_i32_0 = arith.constant 0 : i32
    %c0_i32_1 = arith.constant 0 : i32
    return %c0_i32, %c0_i32_0 : i32, i32
  }
  func.func @transform_9(%arg0: i32) -> (i32, i32) {
    %c0_i32 = arith.constant 0 : i32
    %c0_i32_0 = arith.constant 0 : i32
    %c0_i32_1 = arith.constant 0 : i32
    return %c0_i32, %c0_i32_0 : i32, i32
  }
  func.func @transform_10(%arg0: i32) -> (i32, i32) {
    %c0_i32 = arith.constant 0 : i32
    %c0_i32_0 = arith.constant 0 : i32
    %c0_i32_1 = arith.constant 0 : i32
    return %c0_i32, %c0_i32_0 : i32, i32
  }
  func.func @transform_11(%arg0: i32) -> (i32, i32) {
    %c0_i32 = arith.constant 0 : i32
    %c0_i32_0 = arith.constant 0 : i32
    return %arg0, %c0_i32 : i32, i32
  }
}

</mosaic_0001>

<llo_original>
// kernel: critic_forward.1
$region0: #{critic_forward.1}
  #allocation0 [shape = 'u32[]', space=smem, size = 0x4, offset = 0x4, fixed_abs, tag = 'smem constant byte address 0x4 - core index']
  #allocation1 [shape = 'u32[72,128]{1,0:T(1,128)}', space=vmem, size = 0x9000, scoped, tag = 'internal scratch']
  %s0 = inlined_call_operand.vmem [shape: f32[2,36,49], index: 0, kind: input, shape index: {}]
  %s1 = inlined_call_operand.vmem [shape: f32[2,6], index: 1, kind: input, shape index: {}]
  %s2 = inlined_call_operand.vmem [shape: f32[8,36], index: 2, kind: input, shape index: {}]
  %s3 = inlined_call_operand.vmem [shape: f32[8,1], index: 3, kind: input, shape index: {}]
  %s4 = inlined_call_operand.vmem [shape: f32[49,256], index: 4, kind: input, shape index: {}]
  %s5 = inlined_call_operand.vmem [shape: f32[3,32], index: 5, kind: input, shape index: {}]
  %s6 = inlined_call_operand.vmem [shape: f32[38,128], index: 6, kind: input, shape index: {}]
  %s7 = inlined_call_operand.vmem [shape: f32[2,128], index: 7, kind: input, shape index: {}]
  %s8 = inlined_call_operand.vmem [shape: f32[128,128], index: 8, kind: input, shape index: {}]
  %s9 = inlined_call_operand.vmem [shape: f32[128,2], index: 9, kind: input, shape index: {}]
  %s10 = inlined_call_operand.vmem [shape: f32[1,2], index: 10, kind: input, shape index: {}]
  %s11 = inlined_call_operand.vmem [shape: f32[2,2], index: 11, kind: output, shape index: {}]
  %s12 = sld [smem:[#allocation0]]
  $region54: #{critic_forward.1} parent=0
    _
  %s14 = ssub.s32 1, %s12
  %s15 = scalar_select 0, %s14, %s12
  // Predicated region
  $region2: #{critic_forward.1} parent=0 // pred_check
    _
  $region3: #{critic_forward.1} parent=0 // pred_check_branch
    %17 = sbr.rel (0) target = $region5
  $region4: #{critic_forward.1} parent=0 // pred_region
    _
  $region5: #{critic_forward.1} parent=0 // pred_fallthru
    _
  // Predicated region
  $region6: #{critic_forward.1} parent=0 // pred_check
    _
  $region7: #{critic_forward.1} parent=0 // pred_check_branch
    %19 = sbr.rel (0) target = $region9
  $region8: #{critic_forward.1} parent=0 // pred_region
    _
  $region9: #{critic_forward.1} parent=0 // pred_fallthru
    _
  // Predicated region
  $region10: #{critic_forward.1} parent=0 // pred_check
    _
  $region11: #{critic_forward.1} parent=0 // pred_check_branch
    %21 = sbr.rel (0) target = $region13
  $region12: #{critic_forward.1} parent=0 // pred_region
    _
  $region13: #{critic_forward.1} parent=0 // pred_fallthru
    _
  // Predicated region
  $region14: #{critic_forward.1} parent=0 // pred_check
    _
  $region15: #{critic_forward.1} parent=0 // pred_check_branch
    %23 = sbr.rel (0) target = $region17
  $region16: #{critic_forward.1} parent=0 // pred_region
    _
  $region17: #{critic_forward.1} parent=0 // pred_fallthru
    _
  // Predicated region
  $region18: #{critic_forward.1} parent=0 // pred_check
    _
  $region19: #{critic_forward.1} parent=0 // pred_check_branch
    %25 = sbr.rel (0) target = $region21
  $region20: #{critic_forward.1} parent=0 // pred_region
    _
  $region21: #{critic_forward.1} parent=0 // pred_fallthru
    _
  // Predicated region
  $region22: #{critic_forward.1} parent=0 // pred_check
    _
  $region23: #{critic_forward.1} parent=0 // pred_check_branch
    %27 = sbr.rel (0) target = $region25
  $region24: #{critic_forward.1} parent=0 // pred_region
    _
  $region25: #{critic_forward.1} parent=0 // pred_fallthru
    _
  // Predicated region
  $region26: #{critic_forward.1} parent=0 // pred_check
    _
  $region27: #{critic_forward.1} parent=0 // pred_check_branch
    %29 = sbr.rel (0) target = $region29
  $region28: #{critic_forward.1} parent=0 // pred_region
    _
  $region29: #{critic_forward.1} parent=0 // pred_fallthru
    _
  // Predicated region
  $region30: #{critic_forward.1} parent=0 // pred_check
    _
  $region31: #{critic_forward.1} parent=0 // pred_check_branch
    %31 = sbr.rel (0) target = $region33
  $region32: #{critic_forward.1} parent=0 // pred_region
    _
  $region33: #{critic_forward.1} parent=0 // pred_fallthru
    _
  // Predicated region
  $region34: #{critic_forward.1} parent=0 // pred_check
    _
  $region35: #{critic_forward.1} parent=0 // pred_check_branch
    %33 = sbr.rel (0) target = $region37
  $region36: #{critic_forward.1} parent=0 // pred_region
    _
  $region37: #{critic_forward.1} parent=0 // pred_fallthru
    _
  // Predicated region
  $region38: #{critic_forward.1} parent=0 // pred_check
    _
  $region39: #{critic_forward.1} parent=0 // pred_check_branch
    %35 = sbr.rel (0) target = $region41
  $region40: #{critic_forward.1} parent=0 // pred_region
    _
  $region41: #{critic_forward.1} parent=0 // pred_fallthru
    _
  // Predicated region
  $region42: #{critic_forward.1} parent=0 // pred_check
    _
  $region43: #{critic_forward.1} parent=0 // pred_check_branch
    %37 = sbr.rel (0) target = $region45
  $region44: #{critic_forward.1} parent=0 // pred_region
    _
  $region45: #{critic_forward.1} parent=0 // pred_fallthru
    _
  %v38 = vld [vmem:[%s2] sm:$0xff]
  %v39 = vld [vmem:[%s3] sm:$0xff]
  %v40 = vld [vmem:[%s4] sm:$0xff]
  %v41 = vld [vmem:[%s4 + $0x8] sm:$0xff]
  %v42 = vld [vmem:[%s4 + $0x10] sm:$0xff]
  %v43 = vld [vmem:[%s4 + $0x18] sm:$0xff]
  %v44 = vld [vmem:[%s4 + $0x20] sm:$0xff]
  %v45 = vld [vmem:[%s4 + $0x28] sm:$0xff]
  %v46 = vld [vmem:[%s4 + $0x30] sm:$0xff]
  %v47 = vld [vmem:[%s4 + $0x38] sm:$0xff]
  %v48 = vld [vmem:[%s4 + $0x40] sm:$0xff]
  %v49 = vld [vmem:[%s4 + $0x48] sm:$0xff]
  %v50 = vld [vmem:[%s4 + $0x50] sm:$0xff]
  %v51 = vld [vmem:[%s4 + $0x58] sm:$0xff]
  %v52 = vld [vmem:[%s4 + $0x60] sm:$0x1]
  %v53 = vld [vmem:[%s4 + $0x68] sm:$0x1]
  %v54 = vld [vmem:[%s5] sm:$0x7]
  %v55 = vld [vmem:[%s0] sm:$0xff]
  %v56 = vld [vmem:[%s0 + $0x8] sm:$0xff]
  %v57 = vld [vmem:[%s0 + $0x10] sm:$0xff]
  %v58 = vld [vmem:[%s0 + $0x18] sm:$0xff]
  %v59 = vld [vmem:[%s0 + $0x20] sm:$0xf]
  %61 = vset.pattern.permute.xlu0 0
  %62 = vperm.xlu0 %61, %v39
  %v63 = vpop.permute.xlu0 %62
  %vm65 = vcmask 293888
  %v67 = vsel %vm65, %v38, 0
  %vm69 = vcmask 1043456
  %v71 = vsel %vm69, %v59, 0
  %73 = vmatpush.msra.mxu0 0.0
  %74 = vmatpush.msra.mxu0 0.0
  %75 = vmatpush.msra.mxu0 0.0
  %76 = vmatpush.msra.mxu0 0.0
  %77 = vmatpush.msra.mxu0 0.0
  %78 = vmatpush.msra.mxu0 0.0
  %79 = vmatpush.msra.mxu0 0.0
  %80 = vmatpush.msra.mxu0 0.0
  %81 = vmatpush.msra.mxu0 0.0
  %82 = vmatpush.msra.mxu0 0.0
  %83 = vmatpush.msra.mxu0 0.0
  %84 = vmatpush.msra.mxu0 %v71
  %85 = vmatpush.msra.mxu0 %v58
  %86 = vmatpush.msra.mxu0 %v57
  %87 = vmatpush.msra.mxu0 %v56
  %88 = vmatpush.msra.mxu0 %v55
  %89 = vmatmul.f32.gmra.mxu0 %v67
  %v90 = vpop.f32.mrf.mxu0
  %v91 = vadd.f32 %v63, %v90
  %92 = vdwg.mxu0
  %v93 = vmax.f32 %v91, 0.0
  %vm94 = vcmask 400384
  %v96 = vsel %vm94, %v93, 0
  %vm98 = vcmask 1040384
  %v100 = vsel %vm98, %v52, 0
  %v103 = vsel %vm98, %v53, 0
  %105 = vmatpush.msra.mxu0 0.0
  %106 = vmatpush.msra.mxu0 0.0
  %107 = vmatpush.msra.mxu0 0.0
  %108 = vmatpush.msra.mxu0 0.0
  %109 = vmatpush.msra.mxu0 0.0
  %110 = vmatpush.msra.mxu0 0.0
  %111 = vmatpush.msra.mxu0 0.0
  %112 = vmatpush.msra.mxu0 0.0
  %113 = vmatpush.msra.mxu0 0.0
  %114 = vmatpush.msra.mxu0 %v100
  %115 = vmatpush.msra.mxu0 %v50
  %116 = vmatpush.msra.mxu0 %v48
  %117 = vmatpush.msra.mxu0 %v46
  %118 = vmatpush.msra.mxu0 %v44
  %119 = vmatpush.msra.mxu0 %v42
  %120 = vmatpush.msra.mxu0 %v40
  %121 = vmatmul.f32.gmra.mxu0 %v96
  %v122 = vpop.f32.mrf.mxu0
  %v123 = vadd.f32 0.0, %v122
  %124 = vdwg.mxu0
  %125 = vmatpush.msra.mxu0 0.0
  %126 = vmatpush.msra.mxu0 0.0
  %127 = vmatpush.msra.mxu0 0.0
  %128 = vmatpush.msra.mxu0 0.0
  %129 = vmatpush.msra.mxu0 0.0
  %130 = vmatpush.msra.mxu0 0.0
  %131 = vmatpush.msra.mxu0 0.0
  %132 = vmatpush.msra.mxu0 0.0
  %133 = vmatpush.msra.mxu0 0.0
  %134 = vmatpush.msra.mxu0 %v103
  %135 = vmatpush.msra.mxu0 %v51
  %136 = vmatpush.msra.mxu0 %v49
  %137 = vmatpush.msra.mxu0 %v47
  %138 = vmatpush.msra.mxu0 %v45
  %139 = vmatpush.msra.mxu0 %v43
  %140 = vmatpush.msra.mxu0 %v41
  %141 = vmatmul.f32.gmra.mxu0 %v96
  %v142 = vpop.f32.mrf.mxu0
  %v143 = vadd.f32 0.0, %v142
  %144 = vdwg.mxu0
  %v146 = vrot.slane %v123, 1
  %147 = vrot.lane.b32.xlu0 %v146, 96
  %v148 = vpop.permute.xlu0 %147
  %v150 = vadd.f32 %v123, %v148
  %v151 = vrot.slane %v123, 2
  %152 = vrot.lane.b32.xlu0 %v151, 64
  %v153 = vpop.permute.xlu0 %152
  %v155 = vadd.f32 %v150, %v153
  %v156 = vrot.slane %v123, 3
  %157 = vrot.lane.b32.xlu0 %v156, 32
  %v158 = vpop.permute.xlu0 %157
  %v160 = vadd.f32 %v155, %v158
  %v162 = vrot.slane %v143, 4
  %v164 = vadd.f32 %v160, %v162
  %v165 = vrot.slane %v143, 5
  %166 = vrot.lane.b32.xlu0 %v165, 96
  %v167 = vpop.permute.xlu0 %166
  %v169 = vadd.f32 %v164, %v167
  %v170 = vrot.slane %v143, 6
  %171 = vrot.lane.b32.xlu0 %v170, 64
  %v172 = vpop.permute.xlu0 %171
  %v174 = vadd.f32 %v169, %v172
  %v175 = vrot.slane %v143, 7
  %176 = vrot.lane.b32.xlu0 %v175, 32
  %v177 = vpop.permute.xlu0 %176
  %v179 = vadd.f32 %v174, %v177
  %s180 = scalar_lea.vmem %s0, 40
  %v181 = vld [vmem:[%s180] sm:$0xff]
  %v182 = vld [vmem:[%s180 + $0x8] sm:$0xff]
  %v183 = vld [vmem:[%s180 + $0x10] sm:$0xff]
  %v184 = vld [vmem:[%s180 + $0x18] sm:$0xff]
  %v185 = vld [vmem:[%s180 + $0x20] sm:$0xf]
  %v187 = vsel %vm69, %v185, 0
  %189 = vmatpush.msra.mxu0 0.0
  %190 = vmatpush.msra.mxu0 0.0
  %191 = vmatpush.msra.mxu0 0.0
  %192 = vmatpush.msra.mxu0 0.0
  %193 = vmatpush.msra.mxu0 0.0
  %194 = vmatpush.msra.mxu0 0.0
  %195 = vmatpush.msra.mxu0 0.0
  %196 = vmatpush.msra.mxu0 0.0
  %197 = vmatpush.msra.mxu0 0.0
  %198 = vmatpush.msra.mxu0 0.0
  %199 = vmatpush.msra.mxu0 0.0
  %200 = vmatpush.msra.mxu0 %v187
  %201 = vmatpush.msra.mxu0 %v184
  %202 = vmatpush.msra.mxu0 %v183
  %203 = vmatpush.msra.mxu0 %v182
  %204 = vmatpush.msra.mxu0 %v181
  %205 = vmatmul.f32.gmra.mxu0 %v67
  %v206 = vpop.f32.mrf.mxu0
  %v207 = vadd.f32 %v63, %v206
  %208 = vdwg.mxu0
  %v209 = vmax.f32 %v207, 0.0
  %v211 = vsel %vm94, %v209, 0
  %213 = vmatpush.msra.mxu0 0.0
  %214 = vmatpush.msra.mxu0 0.0
  %215 = vmatpush.msra.mxu0 0.0
  %216 = vmatpush.msra.mxu0 0.0
  %217 = vmatpush.msra.mxu0 0.0
  %218 = vmatpush.msra.mxu0 0.0
  %219 = vmatpush.msra.mxu0 0.0
  %220 = vmatpush.msra.mxu0 0.0
  %221 = vmatpush.msra.mxu0 0.0
  %222 = vmatpush.msra.mxu0 %v100
  %223 = vmatpush.msra.mxu0 %v50
  %224 = vmatpush.msra.mxu0 %v48
  %225 = vmatpush.msra.mxu0 %v46
  %226 = vmatpush.msra.mxu0 %v44
  %227 = vmatpush.msra.mxu0 %v42
  %228 = vmatpush.msra.mxu0 %v40
  %229 = vmatmul.f32.gmra.mxu0 %v211
  %v230 = vpop.f32.mrf.mxu0
  %v231 = vadd.f32 0.0, %v230
  %232 = vdwg.mxu0
  %233 = vmatpush.msra.mxu0 0.0
  %234 = vmatpush.msra.mxu0 0.0
  %235 = vmatpush.msra.mxu0 0.0
  %236 = vmatpush.msra.mxu0 0.0
  %237 = vmatpush.msra.mxu0 0.0
  %238 = vmatpush.msra.mxu0 0.0
  %239 = vmatpush.msra.mxu0 0.0
  %240 = vmatpush.msra.mxu0 0.0
  %241 = vmatpush.msra.mxu0 0.0
  %242 = vmatpush.msra.mxu0 %v103
  %243 = vmatpush.msra.mxu0 %v51
  %244 = vmatpush.msra.mxu0 %v49
  %245 = vmatpush.msra.mxu0 %v47
  %246 = vmatpush.msra.mxu0 %v45
  %247 = vmatpush.msra.mxu0 %v43
  %248 = vmatpush.msra.mxu0 %v41
  %249 = vmatmul.f32.gmra.mxu0 %v211
  %v250 = vpop.f32.mrf.mxu0
  %v251 = vadd.f32 0.0, %v250
  %252 = vdwg.mxu0
  %v254 = vrot.slane %v231, 1
  %255 = vrot.lane.b32.xlu0 %v254, 96
  %v256 = vpop.permute.xlu0 %255
  %v258 = vadd.f32 %v231, %v256
  %v259 = vrot.slane %v231, 2
  %260 = vrot.lane.b32.xlu0 %v259, 64
  %v261 = vpop.permute.xlu0 %260
  %v263 = vadd.f32 %v258, %v261
  %v264 = vrot.slane %v231, 3
  %265 = vrot.lane.b32.xlu0 %v264, 32
  %v266 = vpop.permute.xlu0 %265
  %v268 = vadd.f32 %v263, %v266
  %v270 = vrot.slane %v251, 4
  %v272 = vadd.f32 %v268, %v270
  %v273 = vrot.slane %v251, 5
  %274 = vrot.lane.b32.xlu0 %v273, 96
  %v275 = vpop.permute.xlu0 %274
  %v277 = vadd.f32 %v272, %v275
  %v278 = vrot.slane %v251, 6
  %279 = vrot.lane.b32.xlu0 %v278, 64
  %v280 = vpop.permute.xlu0 %279
  %v282 = vadd.f32 %v277, %v280
  %v283 = vrot.slane %v251, 7
  %284 = vrot.lane.b32.xlu0 %v283, 32
  %v285 = vpop.permute.xlu0 %284
  %v287 = vadd.f32 %v282, %v285
  %v289 = vrot.slane %v287, 7
  %v291 = vsel %vm98, %v179, %v289
  %v292 = vperm.slane %v54, 0
  %v293 = vadd.f32 %v291, %v292
  %vm294 = vcmask 254976
  %v295 = vsel %vm294, %v293, 0.0
  %296 = vadd.xlane.f32.xlu0 %v295
  %v297 = vpop.xlane.xlu0 %296
  %v298 = vmul.f32 %v297, 0.03125
  %v299 = vmul.f32 %v293, %v293
  %v300 = vsel %vm294, %v299, 0.0
  %301 = vadd.xlane.f32.xlu0 %v300
  %v302 = vpop.xlane.xlu0 %301
  %v303 = vmul.f32 %v302, 0.03125
  %v304 = vmul.f32 %v298, %v298
  %v305 = vsub.f32 %v303, %v304
  %v306 = vsub.f32 %v293, %v298
  %v307 = vadd.f32 %v305, 1e-05
  %v308 = vrsqrt.pop %v307
  %v309 = vmul.f32 %v308, %v307
  %v310 = vmul.f32 %v309, %v308
  %v311 = vmul.f32 0.5, %v310
  %v312 = vsub.f32 1.5, %v311
  %v313 = vmul.f32 %v308, %v312
  %vm314 = vweird.f32 %v307
  %vm315 = vweird.f32 %v308
  %vm316 = vmor %vm314, %vm315
  %v317 = vsel %vm316, %v308, %v313
  %v318 = vmul.f32 %v306, %v317
  %v319 = vperm.slane %v54, 1
  %v320 = vmul.f32 %v318, %v319
  %v321 = vperm.slane %v54, 2
  %v322 = vadd.f32 %v320, %v321
  %v323 = vtanh.pop %v322
  %v324 = vld [vmem:[%s1] sm:$0x3]
  %326 = vrot.lane.b32.xlu0 %v324, 32
  %v327 = vpop.permute.xlu0 %326
  %vm329 = vcmask 261120
  %v330 = vsel %vm329, %v323, %v327
  %v331 = vld [vmem:[%s7] sm:$0x3]
  %v332 = vld [vmem:[%s6] sm:$0xff]
  %v333 = vld [vmem:[%s6 + $0x8] sm:$0xff]
  %v334 = vld [vmem:[%s6 + $0x10] sm:$0xff]
  %v335 = vld [vmem:[%s6 + $0x18] sm:$0xff]
  %v336 = vld [vmem:[%s6 + $0x20] sm:$0x3f]
  %v337 = vperm.slane %v331, 0
  %vm338 = vcmask 310272
  %v340 = vsel %vm338, %v330, 0
  %vm342 = vcmask 1045504
  %v344 = vsel %vm342, %v336, 0
  %346 = vmatpush.msra.mxu0 0.0
  %347 = vmatpush.msra.mxu0 0.0
  %348 = vmatpush.msra.mxu0 0.0
  %349 = vmatpush.msra.mxu0 0.0
  %350 = vmatpush.msra.mxu0 0.0
  %351 = vmatpush.msra.mxu0 0.0
  %352 = vmatpush.msra.mxu0 0.0
  %353 = vmatpush.msra.mxu0 0.0
  %354 = vmatpush.msra.mxu0 0.0
  %355 = vmatpush.msra.mxu0 0.0
  %356 = vmatpush.msra.mxu0 0.0
  %357 = vmatpush.msra.mxu0 %v344
  %358 = vmatpush.msra.mxu0 %v335
  %359 = vmatpush.msra.mxu0 %v334
  %360 = vmatpush.msra.mxu0 %v333
  %361 = vmatpush.msra.mxu0 %v332
  %362 = vmatmul.f32.gmra.mxu0 %v340
  %v363 = vpop.f32.mrf.mxu0
  %v364 = vadd.f32 %v337, %v363
  %365 = vdwg.mxu0
  %v366 = vmax.f32 %v364, 0.0
  %v367 = vld [vmem:[%s8] sm:$0xff]
  %v368 = vld [vmem:[%s8 + $0x8] sm:$0xff]
  %v369 = vld [vmem:[%s8 + $0x10] sm:$0xff]
  %v370 = vld [vmem:[%s8 + $0x18] sm:$0xff]
  %v371 = vld [vmem:[%s8 + $0x20] sm:$0xff]
  %v372 = vld [vmem:[%s8 + $0x28] sm:$0xff]
  %v373 = vld [vmem:[%s8 + $0x30] sm:$0xff]
  %v374 = vld [vmem:[%s8 + $0x38] sm:$0xff]
  %v375 = vld [vmem:[%s8 + $0x40] sm:$0xff]
  %v376 = vld [vmem:[%s8 + $0x48] sm:$0xff]
  %v377 = vld [vmem:[%s8 + $0x50] sm:$0xff]
  %v378 = vld [vmem:[%s8 + $0x58] sm:$0xff]
  %v379 = vld [vmem:[%s8 + $0x60] sm:$0xff]
  %v380 = vld [vmem:[%s8 + $0x68] sm:$0xff]
  %v381 = vld [vmem:[%s8 + $0x70] sm:$0xff]
  %v382 = vld [vmem:[%s8 + $0x78] sm:$0xff]
  %v383 = vperm.slane %v331, 1
  %384 = vmatpush.msra.mxu0 %v382
  %385 = vmatpush.msra.mxu0 %v381
  %386 = vmatpush.msra.mxu0 %v380
  %387 = vmatpush.msra.mxu0 %v379
  %388 = vmatpush.msra.mxu0 %v378
  %389 = vmatpush.msra.mxu0 %v377
  %390 = vmatpush.msra.mxu0 %v376
  %391 = vmatpush.msra.mxu0 %v375
  %392 = vmatpush.msra.mxu0 %v374
  %393 = vmatpush.msra.mxu0 %v373
  %394 = vmatpush.msra.mxu0 %v372
  %395 = vmatpush.msra.mxu0 %v371
  %396 = vmatpush.msra.mxu0 %v370
  %397 = vmatpush.msra.mxu0 %v369
  %398 = vmatpush.msra.mxu0 %v368
  %399 = vmatpush.msra.mxu0 %v367
  %400 = vmatmul.f32.gmra.mxu0 %v366
  %v401 = vpop.f32.mrf.mxu0
  %v402 = vadd.f32 %v383, %v401
  %403 = vdwg.mxu0
  %v404 = vmax.f32 %v402, 0.0
  %v405 = vld [vmem:[%s9] sm:$0xff]
  %v406 = vld [vmem:[%s9 + $0x8] sm:$0xff]
  %v407 = vld [vmem:[%s9 + $0x10] sm:$0xff]
  %v408 = vld [vmem:[%s9 + $0x18] sm:$0xff]
  %v409 = vld [vmem:[%s9 + $0x20] sm:$0xff]
  %v410 = vld [vmem:[%s9 + $0x28] sm:$0xff]
  %v411 = vld [vmem:[%s9 + $0x30] sm:$0xff]
  %v412 = vld [vmem:[%s9 + $0x38] sm:$0xff]
  %v413 = vld [vmem:[%s9 + $0x40] sm:$0xff]
  %v414 = vld [vmem:[%s9 + $0x48] sm:$0xff]
  %v415 = vld [vmem:[%s9 + $0x50] sm:$0xff]
  %v416 = vld [vmem:[%s9 + $0x58] sm:$0xff]
  %v417 = vld [vmem:[%s9 + $0x60] sm:$0xff]
  %v418 = vld [vmem:[%s9 + $0x68] sm:$0xff]
  %v419 = vld [vmem:[%s9 + $0x70] sm:$0xff]
  %v420 = vld [vmem:[%s9 + $0x78] sm:$0xff]
  %v421 = vld [vmem:[%s10] sm:$0x1]
  %v423 = vperm.slane %v421, 0
  %425 = vmatpush.msra.mxu0 %v420
  %426 = vmatpush.msra.mxu0 %v419
  %427 = vmatpush.msra.mxu0 %v418
  %428 = vmatpush.msra.mxu0 %v417
  %429 = vmatpush.msra.mxu0 %v416
  %430 = vmatpush.msra.mxu0 %v415
  %431 = vmatpush.msra.mxu0 %v414
  %432 = vmatpush.msra.mxu0 %v413
  %433 = vmatpush.msra.mxu0 %v412
  %434 = vmatpush.msra.mxu0 %v411
  %435 = vmatpush.msra.mxu0 %v410
  %436 = vmatpush.msra.mxu0 %v409
  %437 = vmatpush.msra.mxu0 %v408
  %438 = vmatpush.msra.mxu0 %v407
  %439 = vmatpush.msra.mxu0 %v406
  %440 = vmatpush.msra.mxu0 %v405
  %441 = vmatmul.f32.gmra.mxu0 %v404
  %v442 = vpop.f32.mrf.mxu0
  %v443 = vadd.f32 %v423, %v442
  %444 = vdwg.mxu0
  %vm445 = vcmask 9216
  %446 = vst.msk [vmem:[%s11] sm:$0x3] %vm445, %v443
  // Predicated region
  $region46: #{critic_forward.1} parent=0 // pred_check
    _
  $region47: #{critic_forward.1} parent=0 // pred_check_branch
    %448 = sbr.rel (0) target = $region49
  $region48: #{critic_forward.1} parent=0 // pred_region
    _
  $region49: #{critic_forward.1} parent=0 // pred_fallthru
    _
  // Predicated region
  $region50: #{critic_forward.1} parent=0 // pred_check
    _
  $region51: #{critic_forward.1} parent=0 // pred_check_branch
    %450 = sbr.rel (0) target = $region53
  $region52: #{critic_forward.1} parent=0 // pred_region
    _
  $region53: #{critic_forward.1} parent=0 // pred_fallthru
    _

</llo_original>
